<compile_context>
chip_gen: v5e
topology: v5e:2x2
jax: 0.10.0
libtpu: 0.0.40
codegen_flags: <defaults>
</compile_context>

<pallas_src>
import functools

import jax
import jax.numpy as jnp
from jax.experimental import pallas as pl
from jax.experimental.pallas import tpu as pltpu

LANES = 128
SUBLANES = 8
MAX_TILE_ROWS = 2048  # 2048 x 128 f32 = 1 MiB per input block per grid step


def _recall_kernel(preds_ref, targets_ref, tp_ref, pos_ref,
                   acc_tp, acc_pos, *, tile_rows, total_rows, need_mask):
    """Accumulating reduction over (tile_rows, 128) tiles of the flat inputs."""
    i = pl.program_id(0)

    @pl.when(i == 0)
    def _():
        acc_tp[...] = jnp.zeros_like(acc_tp)
        acc_pos[...] = jnp.zeros_like(acc_pos)

    p = preds_ref[...]
    t = targets_ref[...]

    # sigmoid(p) >= 0.5  <=>  p >= 0.0  (monotone, sigmoid(0) = 0.5).
    pred_pos = p >= 0.0
    true_pos = t >= 0.5

    tp_blk = jnp.logical_and(pred_pos, true_pos).astype(jnp.int32)
    pos_blk = true_pos.astype(jnp.int32)

    if need_mask:
        # Last grid block may extend past the real array; mask invalid rows.
        row_ids = (jax.lax.broadcasted_iota(jnp.int32, tp_blk.shape, 0)
                   + i * tile_rows)
        valid = row_ids < total_rows
        tp_blk = jnp.where(valid, tp_blk, 0)
        pos_blk = jnp.where(valid, pos_blk, 0)

    # (tile_rows,128) -> (g,8,128) is aligned to the (8,128) vreg tiling, so the
    # reshape is layout-free and the axis-0 sum lowers to pure vreg-wise VALU
    # adds into a single-vreg (8,128) int32 accumulator (no per-step XLU work).
    g = tile_rows // SUBLANES
    acc_tp[...] += jnp.sum(tp_blk.reshape(g, SUBLANES, LANES), axis=0)
    acc_pos[...] += jnp.sum(pos_blk.reshape(g, SUBLANES, LANES), axis=0)

    @pl.when(i == pl.num_programs(0) - 1)
    def _():
        # Single small cross-lane/sublane reduce in the epilogue -> SMEM scalars.
        tp_ref[0, 0] = jnp.sum(acc_tp[...])
        pos_ref[0, 0] = jnp.sum(acc_pos[...])


@jax.jit
def recall_counts(preds: jnp.ndarray, targets: jnp.ndarray):
    """Returns (true_positive_i, total_positive_i, recall_i) for this batch."""
    y_pred = preds.reshape(-1)
    y_true = targets.reshape(-1)
    assert y_pred.shape == y_true.shape

    n = y_pred.shape[0]
    # Pad so the flat view reshapes to (rows, 128).  When the whole input fits
    # in a single tile we additionally round rows up to a multiple of 8 so the
    # in-kernel (g,8,128) reshape is always legal; this only ever pads tiny
    # arrays (<= 256K elements).  Pad values can never count as positives
    # (preds pad = -1 -> sigmoid < 0.5; targets pad = 0 -> not positive).
    chunk = SUBLANES * LANES if n <= MAX_TILE_ROWS * LANES else LANES
    n_pad = ((n + chunk - 1) // chunk) * chunk
    if n_pad != n:
        y_pred = jnp.pad(y_pred, (0, n_pad - n), constant_values=-1.0)
        y_true = jnp.pad(y_true, (0, n_pad - n), constant_values=0.0)

    rows = n_pad // LANES
    # Reshape of the contiguous flat array to (rows, 128) is layout-free.
    p2d = y_pred.reshape(rows, LANES)
    t2d = y_true.reshape(rows, LANES)

    if rows <= MAX_TILE_ROWS:
        tile_rows = rows          # block == full array dims (always legal)
        grid = (1,)
        need_mask = False
    else:
        tile_rows = MAX_TILE_ROWS
        grid = (pl.cdiv(rows, tile_rows),)
        need_mask = (rows % tile_rows) != 0

    kernel = functools.partial(
        _recall_kernel,
        tile_rows=tile_rows,
        total_rows=rows,
        need_mask=need_mask,
    )

    tp, pos = pl.pallas_call(
        kernel,
        out_shape=(
            jax.ShapeDtypeStruct((1, 1), jnp.int32),
            jax.ShapeDtypeStruct((1, 1), jnp.int32),
        ),
        grid_spec=pltpu.PrefetchScalarGridSpec(
            num_scalar_prefetch=0,
            grid=grid,
            in_specs=[
                pl.BlockSpec((tile_rows, LANES), lambda i: (i, 0)),
                pl.BlockSpec((tile_rows, LANES), lambda i: (i, 0)),
            ],
            out_specs=[
                pl.BlockSpec((1, 1), lambda i: (0, 0),
                             memory_space=pltpu.SMEM),
                pl.BlockSpec((1, 1), lambda i: (0, 0),
                             memory_space=pltpu.SMEM),
            ],
            scratch_shapes=[
                pltpu.VMEM((SUBLANES, LANES), jnp.int32),
                pltpu.VMEM((SUBLANES, LANES), jnp.int32),
            ],
        ),
        compiler_params=pltpu.CompilerParams(
            dimension_semantics=("arbitrary",)),
    )(p2d, t2d)

    tp_i = tp[0, 0]
    pos_i = pos[0, 0]
    # torch.true_divide of integer counts -> float division (NaN if pos == 0).
    rec_i = tp_i.astype(jnp.float32) / pos_i.astype(jnp.float32)
    return tp_i, pos_i, rec_i


class Recall:
    """Functional port of torchkeras.metrics.Recall (state kept in Python)."""

    def __init__(self):
        # nn.Parameter(torch.tensor(0), requires_grad=False) -> int scalar state
        self.true_positive = jnp.int32(0)
        self.total_positive = jnp.int32(0)

    def __call__(self, preds, targets):
        tp_i, pos_i, rec_i = recall_counts(preds, targets)
        self.true_positive = self.true_positive + tp_i
        self.total_positive = self.total_positive + pos_i
        return rec_i

    def compute(self):
        return self.true_positive.astype(jnp.float32) / \
            self.total_positive.astype(jnp.float32)

    def reset(self):
        self.true_positive = jnp.int32(0)
        self.total_positive = jnp.int32(0)


def _reference(p, t):
    yp = jax.nn.sigmoid(p.reshape(-1)) >= 0.5
    yt = t.reshape(-1) >= 0.5
    tp = jnp.sum(jnp.logical_and(yp, yt).astype(jnp.int32))
    pos = jnp.sum(yt.astype(jnp.int32))
    return tp, pos, tp.astype(jnp.float32) / pos.astype(jnp.float32)


if __name__ == "__main__":
    key = jax.random.PRNGKey(0)
    kp, kt = jax.random.split(key)

    # Binary-classification logits + labels (flattened inside the metric).
    preds = jax.random.normal(kp, (2, 4, 16, 16), dtype=jnp.float32)
    targets = (jax.random.uniform(kt, (2, 4, 16, 16)) > 0.5).astype(jnp.float32)

    metric = Recall()
    rec = metric(preds, targets)
    jax.block_until_ready(rec)

    tp_ref, pos_ref, rec_ref = _reference(preds, targets)
    assert int(metric.true_positive) == int(tp_ref)
    assert int(metric.total_positive) == int(pos_ref)
    assert abs(float(rec) - float(rec_ref)) < 1e-6

    # Extra check: odd size exercising the padded-tail (single tile) path.
    k2, k3 = jax.random.split(kp)
    p_odd = jax.random.normal(k2, (3, 17, 101), dtype=jnp.float32)
    t_odd = (jax.random.uniform(k3, (3, 17, 101)) > 0.5).astype(jnp.float32)
    tp_i, pos_i, _ = recall_counts(p_odd, t_odd)
    tp_r, pos_r, _ = _reference(p_odd, t_odd)
    assert int(tp_i) == int(tp_r) and int(pos_i) == int(pos_r)

    # Extra check: multi-block grid with a masked ragged last block.
    k4, k5 = jax.random.split(kt)
    p_big = jax.random.normal(k4, (300_000,), dtype=jnp.float32)
    t_big = (jax.random.uniform(k5, (300_000,)) > 0.5).astype(jnp.float32)
    tp_i, pos_i, _ = recall_counts(p_big, t_big)
    tp_r, pos_r, _ = _reference(p_big, t_big)
    assert int(tp_i) == int(tp_r) and int(pos_i) == int(pos_r)

    print("KERNEL_OK")
</pallas_src>

<mosaic_0001>
module attributes {stable_mosaic.version = 11 : i64} {
  func.func @_recall_kernel(%arg0: i32, %arg1: memref<16x128xf32, #tpu.memory_space<vmem>>, %arg2: memref<16x128xf32, #tpu.memory_space<vmem>>, %arg3: memref<1x1xi32, #tpu.memory_space<smem>>, %arg4: memref<1x1xi32, #tpu.memory_space<smem>>, %arg5: memref<8x128xi32, #tpu.memory_space<vmem>>, %arg6: memref<8x128xi32, #tpu.memory_space<vmem>>) attributes {dimension_semantics = [#tpu.dimension_semantics<arbitrary>], iteration_bounds = array<i64: 1>, scalar_prefetch = 0 : i64, scratch_operands = 2 : i64, tpu.core_type = #tpu.core_type<tc>, window_params = [{transform_indices = @transform_0, window_bounds = array<i64: 16, 128>}, {transform_indices = @transform_1, window_bounds = array<i64: 16, 128>}, {transform_indices = @transform_2, window_bounds = array<i64: 1, 1>}, {transform_indices = @transform_3, window_bounds = array<i64: 1, 1>}]} {
    %c0_i32 = arith.constant 0 : i32
    %0 = arith.cmpi eq, %arg0, %c0_i32 : i32
    %1 = arith.extui %0 : i1 to i32
    %c0_i32_0 = arith.constant 0 : i32
    %2 = arith.cmpi ne, %1, %c0_i32_0 : i32
    scf.if %2 {
      %c0_i32_17 = arith.constant 0 : i32
      %25 = vector.broadcast %c0_i32_17 : i32 to vector<8x128xi32>
      %c0_18 = arith.constant 0 : index
      %c0_19 = arith.constant 0 : index
      %26 = vector.load %arg5[%c0_18, %c0_19] : memref<8x128xi32, #tpu.memory_space<vmem>>, vector<8x128xi32>
      tpu.vector_store %arg5[%c0_18, %c0_19], %25 {strides = array<i32>} : memref<8x128xi32, #tpu.memory_space<vmem>>, vector<8x128xi32>,
      %c0_i32_20 = arith.constant 0 : i32
      %27 = vector.broadcast %c0_i32_20 : i32 to vector<8x128xi32>
      %c0_21 = arith.constant 0 : index
      %c0_22 = arith.constant 0 : index
      %28 = vector.load %arg6[%c0_21, %c0_22] : memref<8x128xi32, #tpu.memory_space<vmem>>, vector<8x128xi32>
      tpu.vector_store %arg6[%c0_21, %c0_22], %27 {strides = array<i32>} : memref<8x128xi32, #tpu.memory_space<vmem>>, vector<8x128xi32>,
    } else {
    }
    %c0 = arith.constant 0 : index
    %c0_1 = arith.constant 0 : index
    %3 = vector.load %arg1[%c0, %c0_1] : memref<16x128xf32, #tpu.memory_space<vmem>>, vector<16x128xf32>
    %c0_2 = arith.constant 0 : index
    %c0_3 = arith.constant 0 : index
    %4 = vector.load %arg2[%c0_2, %c0_3] : memref<16x128xf32, #tpu.memory_space<vmem>>, vector<16x128xf32>
    %cst = arith.constant 0.000000e+00 : f32
    %5 = vector.broadcast %cst : f32 to vector<16x128xf32>
    %6 = arith.cmpf oge, %3, %5 : vector<16x128xf32>
    %cst_4 = arith.constant 5.000000e-01 : f32
    %7 = vector.broadcast %cst_4 : f32 to vector<16x128xf32>
    %8 = arith.cmpf oge, %4, %7 : vector<16x128xf32>
    %9 = arith.andi %6, %8 : vector<16x128xi1>
    %10 = arith.extui %9 : vector<16x128xi1> to vector<16x128xi32>
    %11 = arith.extui %8 : vector<16x128xi1> to vector<16x128xi32>
    %c0_5 = arith.constant 0 : index
    %c0_6 = arith.constant 0 : index
    %12 = vector.load %arg5[%c0_5, %c0_6] : memref<8x128xi32, #tpu.memory_space<vmem>>, vector<8x128xi32>
    %13 = vector.shape_cast %10 : vector<16x128xi32> to vector<2x8x128xi32>
    %cst_7 = arith.constant dense<0> : vector<8x128xi32>
    %14 = vector.multi_reduction <add>, %13, %cst_7 [0] : vector<2x8x128xi32> to vector<8x128xi32>
    %15 = arith.addi %12, %14 : vector<8x128xi32>
    %c0_8 = arith.constant 0 : index
    %c0_9 = arith.constant 0 : index
    %16 = vector.load %arg5[%c0_8, %c0_9] : memref<8x128xi32, #tpu.memory_space<vmem>>, vector<8x128xi32>
    tpu.vector_store %arg5[%c0_8, %c0_9], %15 {strides = array<i32>} : memref<8x128xi32, #tpu.memory_space<vmem>>, vector<8x128xi32>,
    %c0_10 = arith.constant 0 : index
    %c0_11 = arith.constant 0 : index
    %17 = vector.load %arg6[%c0_10, %c0_11] : memref<8x128xi32, #tpu.memory_space<vmem>>, vector<8x128xi32>
    %18 = vector.shape_cast %11 : vector<16x128xi32> to vector<2x8x128xi32>
    %cst_12 = arith.constant dense<0> : vector<8x128xi32>
    %19 = vector.multi_reduction <add>, %18, %cst_12 [0] : vector<2x8x128xi32> to vector<8x128xi32>
    %20 = arith.addi %17, %19 : vector<8x128xi32>
    %c0_13 = arith.constant 0 : index
    %c0_14 = arith.constant 0 : index
    %21 = vector.load %arg6[%c0_13, %c0_14] : memref<8x128xi32, #tpu.memory_space<vmem>>, vector<8x128xi32>
    tpu.vector_store %arg6[%c0_13, %c0_14], %20 {strides = array<i32>} : memref<8x128xi32, #tpu.memory_space<vmem>>, vector<8x128xi32>,
    %c0_i32_15 = arith.constant 0 : i32
    %22 = arith.cmpi eq, %arg0, %c0_i32_15 : i32
    %23 = arith.extui %22 : i1 to i32
    %c0_i32_16 = arith.constant 0 : i32
    %24 = arith.cmpi ne, %23, %c0_i32_16 : i32
    scf.if %24 {
      %c0_17 = arith.constant 0 : index
      %c0_18 = arith.constant 0 : index
      %25 = vector.load %arg5[%c0_17, %c0_18] : memref<8x128xi32, #tpu.memory_space<vmem>>, vector<8x128xi32>
      %26 = vector.shape_cast %25 : vector<8x128xi32> to vector<1x8x128xi32>
      %cst_19 = arith.constant dense<0> : vector<1xi32>
      %27 = vector.multi_reduction <add>, %26, %cst_19 [1, 2] : vector<1x8x128xi32> to vector<1xi32>
      %28 = vector.shape_cast %27 : vector<1xi32> to vector<1x1x1xi32>
      %29 = vector.extract %28[0, 0, 0] : i32 from vector<1x1x1xi32>
      %c0_20 = arith.constant 0 : index
      %c0_21 = arith.constant 0 : index
      %30 = memref.load %arg3[%c0_20, %c0_21] : memref<1x1xi32, #tpu.memory_space<smem>>
      memref.store %29, %arg3[%c0_20, %c0_21] : memref<1x1xi32, #tpu.memory_space<smem>>
      %c0_22 = arith.constant 0 : index
      %c0_23 = arith.constant 0 : index
      %31 = vector.load %arg6[%c0_22, %c0_23] : memref<8x128xi32, #tpu.memory_space<vmem>>, vector<8x128xi32>
      %32 = vector.shape_cast %31 : vector<8x128xi32> to vector<1x8x128xi32>
      %cst_24 = arith.constant dense<0> : vector<1xi32>
      %33 = vector.multi_reduction <add>, %32, %cst_24 [1, 2] : vector<1x8x128xi32> to vector<1xi32>
      %34 = vector.shape_cast %33 : vector<1xi32> to vector<1x1x1xi32>
      %35 = vector.extract %34[0, 0, 0] : i32 from vector<1x1x1xi32>
      %c0_25 = arith.constant 0 : index
      %c0_26 = arith.constant 0 : index
      %36 = memref.load %arg4[%c0_25, %c0_26] : memref<1x1xi32, #tpu.memory_space<smem>>
      memref.store %35, %arg4[%c0_25, %c0_26] : memref<1x1xi32, #tpu.memory_space<smem>>
    } else {
    }
    return
  }
  func.func @transform_0(%arg0: i32) -> (i32, i32) {
    %c0_i32 = arith.constant 0 : i32
    %c0_i32_0 = arith.constant 0 : i32
    return %arg0, %c0_i32 : i32, i32
  }
  func.func @transform_1(%arg0: i32) -> (i32, i32) {
    %c0_i32 = arith.constant 0 : i32
    %c0_i32_0 = arith.constant 0 : i32
    return %arg0, %c0_i32 : i32, i32
  }
  func.func @transform_2(%arg0: i32) -> (i32, i32) {
    %c0_i32 = arith.constant 0 : i32
    %c0_i32_0 = arith.constant 0 : i32
    %c0_i32_1 = arith.constant 0 : i32
    return %c0_i32, %c0_i32_0 : i32, i32
  }
  func.func @transform_3(%arg0: i32) -> (i32, i32) {
    %c0_i32 = arith.constant 0 : i32
    %c0_i32_0 = arith.constant 0 : i32
    %c0_i32_1 = arith.constant 0 : i32
    return %c0_i32, %c0_i32_0 : i32, i32
  }
}

</mosaic_0001>

<llo_original>
// kernel: recall_counts.1
$region0: #{recall_counts.1}
  #allocation0 [shape = 'u32[]', space=smem, size = 0x4, offset = 0x4, fixed_abs, tag = 'smem constant byte address 0x4 - core index']
  #allocation1 [shape = 'u32[72,128]{1,0:T(1,128)}', space=vmem, size = 0x9000, scoped, tag = 'internal scratch']
  #allocation2 [shape = 's32[8,128]{1,0:T(8,128)}', space=vmem, size = 0x1000, scoped, tag = 'scratch operand']
  #allocation3 [shape = 's32[8,128]{1,0:T(8,128)}', space=vmem, size = 0x1000, scoped, tag = 'scratch operand']
  %s0 = inlined_call_operand.vmem [shape: f32[16,128], index: 0, kind: input, shape index: {}]
  %s1 = inlined_call_operand.vmem [shape: f32[16,128], index: 1, kind: input, shape index: {}]
  %s2 = inlined_call_operand.hbm [shape: s32[1,1], index: 2, kind: output, shape index: {0}]
  %s3 = inlined_call_operand.hbm [shape: s32[1,1], index: 3, kind: output, shape index: {1}]
  %4 = xla_tuple %s2, %s3
  %s5 = sld [smem:[#allocation0]]
  $region34: #{recall_counts.1} parent=0
    _
  %s7 = ssub.s32 1, %s5
  %s8 = scalar_select 0, %s7, %s5
  $region1: #{recall_counts.1} parent=0
    #allocation4 [shape = 'u8[512]{0}', space=smem, size = 0x200, scoped, tag = 'output window, operand 0, single buffered']
    #allocation5 [shape = 's32[1]{0}', space=sflag, size = 0x4, scoped, tag = 'scoped memory for recall_counts.1']
    #allocation6 [shape = 'u8[512]{0}', space=smem, size = 0x200, scoped, tag = 'output window, operand 1, single buffered']
    #allocation7 [shape = 's32[1]{0}', space=sflag, size = 0x4, scoped, tag = 'scoped memory for recall_counts.1']
    %9 = vsyncpa [#allocation5], 0
    %10 = vsyncpa [#allocation7], 0
    // Predicated region
    $region2: #{recall_counts.1} parent=1 // pred_check
      _
    $region3: #{recall_counts.1} parent=1 // pred_check_branch
      %12 = sbr.rel (0) target = $region5
    $region4: #{recall_counts.1} parent=1 // pred_region
      _
    $region5: #{recall_counts.1} parent=1 // pred_fallthru
      _
    // Predicated region
    $region6: #{recall_counts.1} parent=1 // pred_check
      _
    $region7: #{recall_counts.1} parent=1 // pred_check_branch
      %14 = sbr.rel (0) target = $region9
    $region8: #{recall_counts.1} parent=1 // pred_region
      _
    $region9: #{recall_counts.1} parent=1 // pred_fallthru
      _
    %p15 = scmp.eq.s32.totalorder 0, 0
    // Predicated region
    $region10: #{recall_counts.1} parent=1 // pred_check
      %p16 = pneg %p15
    $region11: #{recall_counts.1} parent=1 // pred_check_branch
      %18 = sbr.rel (%p16) target = $region13
    $region12: #{recall_counts.1} parent=1 // pred_region
      %19 = vst [vmem:[#allocation2] sm:$0xff] 0
      %20 = vst [vmem:[#allocation3] sm:$0xff] 0
    $region13: #{recall_counts.1} parent=1 // pred_fallthru
      _
    %v21 = vld [vmem:[%s0] sm:$0xff]
    %v22 = vld [vmem:[%s0 + $0x8] sm:$0xff]
    %v23 = vld [vmem:[%s1] sm:$0xff]
    %v24 = vld [vmem:[%s1 + $0x8] sm:$0xff]
    %vm25 = vcmp.ge.f32.partialorder %v21, 0.0
    %vm26 = vcmp.ge.f32.partialorder %v22, 0.0
    %vm27 = vcmp.ge.f32.partialorder %v23, 0.5
    %vm28 = vcmp.ge.f32.partialorder %v24, 0.5
    %vm29 = vmand %vm25, %vm27
    %vm30 = vmand %vm26, %vm28
    %v31 = vsel %vm29, 1, 0
    %v32 = vsel %vm30, 1, 0
    %v33 = vsel %vm27, 1, 0
    %v34 = vsel %vm28, 1, 0
    %v35 = vld [vmem:[#allocation2] sm:$0xff]
    %v36 = vadd.s32 %v31, %v32
    %v37 = vadd.s32 %v35, %v36
    %38 = vst [vmem:[#allocation2] sm:$0xff] %v37
    %v39 = vld [vmem:[#allocation3] sm:$0xff]
    %v40 = vadd.s32 %v33, %v34
    %v41 = vadd.s32 %v39, %v40
    %42 = vst [vmem:[#allocation3] sm:$0xff] %v41
    // Predicated region
    $region14: #{recall_counts.1} parent=1 // pred_check
      %p43 = pneg %p15
    $region15: #{recall_counts.1} parent=1 // pred_check_branch
      %45 = sbr.rel (%p43) target = $region17
    $region16: #{recall_counts.1} parent=1 // pred_region
      %v46 = vld [vmem:[#allocation2] sm:$0xff]
      %v47 = vand.u32 %v46, 65535
      %v48 = vshrl.u32 %v46, 16
      %v49 = vcvt.s32.f32 %v47
      %v50 = vcvt.s32.f32 %v48
      %51 = vadd.xlane.f32.xlu0 %v49
      %v52 = vpop.xlane.xlu0 %51
      %53 = vadd.xlane.f32.xlu0 %v50
      %v54 = vpop.xlane.xlu0 %53
      %v55 = vcvt.f32.s32 %v52
      %v56 = vcvt.f32.s32 %v54
      %v57 = vshll.u32 %v56, 16
      %v58 = vadd.s32 %v57, %v55
      %v59 = vrot.slane %v58, 4
      %v60 = vadd.s32 %v58, %v59
      %v61 = vrot.slane %v60, 2
      %v62 = vadd.s32 %v60, %v61
      %v63 = vrot.slane %v62, 1
      %v64 = vadd.s32 %v62, %v63
      %s65 = vtos %v64
      %s66 = scalar_lea.smem [#allocation4], 0
      %67 = sst [smem:[%s66]] %s65
      %v68 = vld [vmem:[#allocation3] sm:$0xff]
      %v69 = vand.u32 %v68, 65535
      %v70 = vshrl.u32 %v68, 16
      %v71 = vcvt.s32.f32 %v69
      %v72 = vcvt.s32.f32 %v70
      %73 = vadd.xlane.f32.xlu0 %v71
      %v74 = vpop.xlane.xlu0 %73
      %75 = vadd.xlane.f32.xlu0 %v72
      %v76 = vpop.xlane.xlu0 %75
      %v77 = vcvt.f32.s32 %v74
      %v78 = vcvt.f32.s32 %v76
      %v79 = vshll.u32 %v78, 16
      %v80 = vadd.s32 %v79, %v77
      %v81 = vrot.slane %v80, 4
      %v82 = vadd.s32 %v80, %v81
      %v83 = vrot.slane %v82, 2
      %v84 = vadd.s32 %v82, %v83
      %v85 = vrot.slane %v84, 1
      %v86 = vadd.s32 %v84, %v85
      %s87 = vtos %v86
      %s88 = scalar_lea.smem [#allocation6], 0
      %89 = sst [smem:[%s88]] %s87
    $region17: #{recall_counts.1} parent=1 // pred_fallthru
      _
    // Predicated region
    $region18: #{recall_counts.1} parent=1 // pred_check
      _
    $region19: #{recall_counts.1} parent=1 // pred_check_branch
      %91 = sbr.rel (0) target = $region21
    $region20: #{recall_counts.1} parent=1 // pred_region
      %93 = vsyncadd [#allocation5], 0
      %s95 = sshll.u32 %s2, 4
      %s96 = int_to_ptr.hbm [resolvable:$true] %s95
      %98 = dma.smem_to_hbm [#allocation4], 16, %s96, [#allocation5]
    $region21: #{recall_counts.1} parent=1 // pred_fallthru
      _
    // Predicated region
    $region22: #{recall_counts.1} parent=1 // pred_check
      _
    $region23: #{recall_counts.1} parent=1 // pred_check_branch
      %100 = sbr.rel (0) target = $region25
    $region24: #{recall_counts.1} parent=1 // pred_region
      %102 = vsyncadd [#allocation7], 0
      %s104 = sshll.u32 %s3, 4
      %s105 = int_to_ptr.hbm [resolvable:$true] %s104
      %107 = dma.smem_to_hbm [#allocation6], 16, %s105, [#allocation7]
    $region25: #{recall_counts.1} parent=1 // pred_fallthru
      _
    // Predicated region
    $region26: #{recall_counts.1} parent=1 // pred_check
      _
    $region27: #{recall_counts.1} parent=1 // pred_check_branch
      %109 = sbr.rel (0) target = $region29
    $region28: #{recall_counts.1} parent=1 // pred_region
      %111 = dma.done [#allocation5], 16
    $region29: #{recall_counts.1} parent=1 // pred_fallthru
      _
    // Predicated region
    $region30: #{recall_counts.1} parent=1 // pred_check
      _
    $region31: #{recall_counts.1} parent=1 // pred_check_branch
      %113 = sbr.rel (0) target = $region33
    $region32: #{recall_counts.1} parent=1 // pred_region
      %115 = dma.done [#allocation7], 16
    $region33: #{recall_counts.1} parent=1 // pred_fallthru
      _
    %116 = sfence
    %117 = vsyncpa [#allocation5], 1
    %118 = vsyncpa [#allocation7], 1

</llo_original>
